<compile_context>
chip_gen: v6e
topology: v6e:2x2x1
jax: 0.10.0
libtpu: 0.0.40
codegen_flags: <defaults>
</compile_context>

<pallas_src>
import jax
import jax.numpy as jnp
from jax.experimental import pallas as pl
from jax.experimental.pallas import tpu as pltpu

_NCORES = 2     # leading "parallel" grid axis (v7x has 2 TCs; harmless on 1-TC chips)
_SUBLANE = 8    # f32 sublane tile height


def _val_smoothing_kernel(x_ref, t_ref, o_ref):
    i = pl.program_id(1)  # position along the reduction ("arbitrary") axis

    @pl.when(i == 0)
    def _init():
        o_ref[...] = jnp.zeros_like(o_ref)

    x = x_ref[...].astype(jnp.float32)   # (tb, V)
    t = t_ref[...].astype(jnp.float32)   # (tb, V)

    # numerically-stable log_softmax along the class (lane) axis
    m = jnp.max(x, axis=-1, keepdims=True)
    lse = m + jnp.log(jnp.sum(jnp.exp(x - m), axis=-1, keepdims=True))
    logp = x - lse

    # KL term t*(log t - logp).  Single select: when t == 0, (log 1 - logp) is
    # finite and multiplied by 0, giving exactly 0 (xlogy convention).
    safe_t = jnp.where(t > 0, t, 1.0)
    contrib = t * (jnp.log(safe_t) - logp)

    # Fold (tb, V) -> (8, V) with sublane-blocked adds (pure VPU, vreg-wise),
    # accumulate into the per-core resident output block.
    tb, v = contrib.shape
    o_ref[...] += contrib.reshape(tb // _SUBLANE, _SUBLANE, v).sum(axis=0)


def _round_up(x, m):
    return ((x + m - 1) // m) * m


def _vmem_capacity_bytes():
    # Generation-aware physical VMEM; conservative fallback works on all chips.
    try:
        cap = int(pltpu.get_tpu_info().vmem_capacity_bytes)
        if cap > 0:
            return cap
    except Exception:
        pass
    return 64 << 20  # v7x physical VMEM (smallest of the three generations)


def _choose_row_tile(batch, vocab, xs_isz, t_isz, vmem_cap):
    """Rows per block: as large as the VMEM budget allows (accumulator no longer
    scales with tb), rounded to the dtype's sublane multiple, capped only by the
    per-core batch."""
    sub = max(_SUBLANE, 32 // min(xs_isz, t_isz))   # 8 (f32) / 16 (bf16) / 32 (int8)
    budget = int(0.70 * vmem_cap)                   # headroom for out block + internals
    per_row = 2 * (xs_isz + t_isz) * vocab          # 2 pipeline buffers per input
    tb = budget // max(per_row, 1)
    per_core = _round_up(-(-batch // _NCORES), sub)
    tb = min(tb, per_core)
    tb = max((tb // sub) * sub, sub)
    return tb


def val_smoothing(xs, targets, *, row_tile=None):
    """xs, targets: (B, V). Returns scalar KLDivLoss(batchmean) over log_softmax(xs)."""
    B, V = xs.shape
    xs_isz = jnp.dtype(xs.dtype).itemsize
    t_isz = jnp.dtype(targets.dtype).itemsize
    vmem_cap = _vmem_capacity_bytes()

    if row_tile is None:
        tb = _choose_row_tile(B, V, xs_isz, t_isz, vmem_cap)
    else:
        sub = max(_SUBLANE, 32 // min(xs_isz, t_isz))
        tb = _round_up(int(row_tile), sub)

    steps = -(-B // (_NCORES * tb))          # ceil; grid steps per core
    bp = _NCORES * tb * steps
    if bp != B:
        pad = bp - B
        # zero target rows contribute exactly 0, so padding is loss-neutral
        xs = jnp.pad(xs, ((0, pad), (0, 0)))
        targets = jnp.pad(targets, ((0, pad), (0, 0)))

    # VMEM: input double-buffers + tiny (8, V) per-core output block + headroom
    # for Mosaic-internal scratch; clamp to physical capacity minus 12 MiB so the
    # limit is always valid (notably on v7x's 64 MiB VMEM).
    vmem_bytes = 2 * tb * V * (xs_isz + t_isz) + 2 * _SUBLANE * V * 4 + (8 << 20)
    vmem_bytes = int(max(vmem_bytes, 16 << 20))
    vmem_bytes = int(min(vmem_bytes, vmem_cap - (12 << 20)))

    grid = (_NCORES, steps)

    partials = pl.pallas_call(
        _val_smoothing_kernel,
        out_shape=jax.ShapeDtypeStruct((_NCORES * _SUBLANE, V), jnp.float32),
        grid_spec=pltpu.PrefetchScalarGridSpec(
            num_scalar_prefetch=0,
            grid=grid,
            in_specs=[
                pl.BlockSpec((tb, V), lambda c, i: (c * steps + i, 0)),
                pl.BlockSpec((tb, V), lambda c, i: (c * steps + i, 0)),
            ],
            # per-core resident accumulator block (written every step, flushed once)
            out_specs=pl.BlockSpec((_SUBLANE, V), lambda c, i: (c, 0)),
        ),
        compiler_params=pltpu.CompilerParams(
            dimension_semantics=("parallel", "arbitrary"),
            vmem_limit_bytes=vmem_bytes,
        ),
    )(xs, targets)

    # batchmean divides by the TRUE batch size (host constant), not the padded one.
    return jnp.sum(partials) / jnp.float32(B)


if __name__ == "__main__":
    key = jax.random.PRNGKey(0)
    k1, k2 = jax.random.split(key)

    def ref_loss(xs, targets):
        x = xs.astype(jnp.float32)
        t = targets.astype(jnp.float32)
        logp = jax.nn.log_softmax(x, axis=-1)
        xlogy = jnp.where(t > 0, t * jnp.log(jnp.where(t > 0, t, 1.0)), 0.0)
        return jnp.sum(xlogy - t * logp) / x.shape[0]

    B, V = 48, 128
    xs = jax.random.normal(k1, (B, V), dtype=jnp.float32)
    targets = jax.nn.softmax(jax.random.normal(k2, (B, V), dtype=jnp.float32), axis=-1)

    # f32, forced small row tile -> exercises the multi-step accumulation path
    loss = val_smoothing(xs, targets, row_tile=8)
    jax.block_until_ready(loss)
    assert jnp.allclose(loss, ref_loss(xs, targets), rtol=1e-5, atol=1e-6), (
        loss, ref_loss(xs, targets))

    # f32, auto tile (batch smaller than one tile -> zero-padded rows)
    loss_auto = val_smoothing(xs[:8], targets[:8])
    jax.block_until_ready(loss_auto)
    assert jnp.allclose(loss_auto, ref_loss(xs[:8], targets[:8]),
                        rtol=1e-5, atol=1e-6), (loss_auto, ref_loss(xs[:8], targets[:8]))

    # bf16 inputs (halves HBM bytes on v5e/v6e); kernel math stays f32
    xs_bf = xs.astype(jnp.bfloat16)
    t_bf = targets.astype(jnp.bfloat16)
    loss_bf = val_smoothing(xs_bf, t_bf)
    jax.block_until_ready(loss_bf)
    assert jnp.allclose(loss_bf, ref_loss(xs_bf, t_bf), rtol=1e-4, atol=1e-5), (
        loss_bf, ref_loss(xs_bf, t_bf))

    print("KERNEL_OK")
</pallas_src>

<mosaic_0001>
module attributes {stable_mosaic.version = 11 : i64} {
  func.func @_val_smoothing_kernel(%arg0: i32, %arg1: i32, %arg2: memref<8x128xf32, #tpu.memory_space<vmem>>, %arg3: memref<8x128xf32, #tpu.memory_space<vmem>>, %arg4: memref<8x128xf32, #tpu.memory_space<vmem>>) attributes {dimension_semantics = [#tpu.dimension_semantics<parallel>, #tpu.dimension_semantics<arbitrary>], iteration_bounds = array<i64: 2, 3>, scalar_prefetch = 0 : i64, scratch_operands = 0 : i64, tpu.core_type = #tpu.core_type<tc>, window_params = [{transform_indices = @transform_0, window_bounds = array<i64: 8, 128>}, {transform_indices = @transform_1, window_bounds = array<i64: 8, 128>}, {transform_indices = @transform_2, window_bounds = array<i64: 8, 128>}]} {
    %c0_i32 = arith.constant 0 : i32
    %0 = arith.cmpi eq, %arg1, %c0_i32 : i32
    %1 = arith.extui %0 : i1 to i32
    %c0_i32_0 = arith.constant 0 : i32
    %2 = arith.cmpi ne, %1, %c0_i32_0 : i32
    scf.if %2 {
      %cst_12 = arith.constant 0.000000e+00 : f32
      %28 = vector.broadcast %cst_12 : f32 to vector<8x128xf32>
      %c0_13 = arith.constant 0 : index
      %c0_14 = arith.constant 0 : index
      %29 = vector.load %arg4[%c0_13, %c0_14] : memref<8x128xf32, #tpu.memory_space<vmem>>, vector<8x128xf32>
      tpu.vector_store %arg4[%c0_13, %c0_14], %28 {strides = array<i32>} : memref<8x128xf32, #tpu.memory_space<vmem>>, vector<8x128xf32>,
    } else {
    }
    %c0 = arith.constant 0 : index
    %c0_1 = arith.constant 0 : index
    %3 = vector.load %arg2[%c0, %c0_1] : memref<8x128xf32, #tpu.memory_space<vmem>>, vector<8x128xf32>
    %c0_2 = arith.constant 0 : index
    %c0_3 = arith.constant 0 : index
    %4 = vector.load %arg3[%c0_2, %c0_3] : memref<8x128xf32, #tpu.memory_space<vmem>>, vector<8x128xf32>
    %cst = arith.constant dense<0xFF800000> : vector<8xf32>
    %5 = vector.multi_reduction <maximumf>, %3, %cst [1] : vector<8x128xf32> to vector<8xf32>
    %6 = vector.shape_cast %5 : vector<8xf32> to vector<8x1xf32>
    %7 = vector.broadcast %6 : vector<8x1xf32> to vector<8x128xf32>
    %8 = arith.subf %3, %7 : vector<8x128xf32>
    %9 = math.exp %8 : vector<8x128xf32>
    %cst_4 = arith.constant dense<0.000000e+00> : vector<8xf32>
    %10 = vector.multi_reduction <add>, %9, %cst_4 [1] : vector<8x128xf32> to vector<8xf32>
    %11 = vector.shape_cast %10 : vector<8xf32> to vector<8x1xf32>
    %12 = math.log %11 : vector<8x1xf32>
    %13 = arith.addf %6, %12 : vector<8x1xf32>
    %14 = vector.broadcast %13 : vector<8x1xf32> to vector<8x128xf32>
    %15 = arith.subf %3, %14 : vector<8x128xf32>
    %cst_5 = arith.constant 0.000000e+00 : f32
    %16 = vector.broadcast %cst_5 : f32 to vector<8x128xf32>
    %17 = arith.cmpf ogt, %4, %16 : vector<8x128xf32>
    %cst_6 = arith.constant 1.000000e+00 : f32
    %18 = vector.broadcast %cst_6 : f32 to vector<8x128xf32>
    %19 = arith.select %17, %4, %18 : vector<8x128xi1>, vector<8x128xf32>
    %20 = math.log %19 : vector<8x128xf32>
    %21 = arith.subf %20, %15 : vector<8x128xf32>
    %22 = arith.mulf %4, %21 : vector<8x128xf32>
    %c0_7 = arith.constant 0 : index
    %c0_8 = arith.constant 0 : index
    %23 = vector.load %arg4[%c0_7, %c0_8] : memref<8x128xf32, #tpu.memory_space<vmem>>, vector<8x128xf32>
    %24 = vector.shape_cast %22 : vector<8x128xf32> to vector<1x8x128xf32>
    %cst_9 = arith.constant dense<0.000000e+00> : vector<8x128xf32>
    %25 = vector.multi_reduction <add>, %24, %cst_9 [0] : vector<1x8x128xf32> to vector<8x128xf32>
    %26 = arith.addf %23, %25 : vector<8x128xf32>
    %c0_10 = arith.constant 0 : index
    %c0_11 = arith.constant 0 : index
    %27 = vector.load %arg4[%c0_10, %c0_11] : memref<8x128xf32, #tpu.memory_space<vmem>>, vector<8x128xf32>
    tpu.vector_store %arg4[%c0_10, %c0_11], %26 {strides = array<i32>} : memref<8x128xf32, #tpu.memory_space<vmem>>, vector<8x128xf32>,
    return
  }
  func.func @transform_0(%arg0: i32, %arg1: i32) -> (i32, i32) {
    %c3_i32 = arith.constant 3 : i32
    %0 = arith.muli %arg0, %c3_i32 : i32
    %1 = arith.addi %0, %arg1 : i32
    %c0_i32 = arith.constant 0 : i32
    %c0_i32_0 = arith.constant 0 : i32
    return %1, %c0_i32 : i32, i32
  }
  func.func @transform_1(%arg0: i32, %arg1: i32) -> (i32, i32) {
    %c3_i32 = arith.constant 3 : i32
    %0 = arith.muli %arg0, %c3_i32 : i32
    %1 = arith.addi %0, %arg1 : i32
    %c0_i32 = arith.constant 0 : i32
    %c0_i32_0 = arith.constant 0 : i32
    return %1, %c0_i32 : i32, i32
  }
  func.func @transform_2(%arg0: i32, %arg1: i32) -> (i32, i32) {
    %c0_i32 = arith.constant 0 : i32
    %c0_i32_0 = arith.constant 0 : i32
    return %arg0, %c0_i32 : i32, i32
  }
}

</mosaic_0001>

<llo_original>
// kernel: tpu_custom_call.1
$region0: #{tpu_custom_call.1}
  #allocation0 [shape = 'u32[]', space=smem, size = 0x4, offset = 0x4, fixed_abs, tag = 'smem constant byte address 0x4 - core index']
  #allocation1 [shape = 'u32[144,128]{1,0:T(1,128)}', space=vmem, size = 0x12000, scoped, tag = 'internal scratch']
  %s0 = inlined_call_operand.hbm [shape: f32[48,128], index: 0, kind: input, shape index: {}]
  %s1 = inlined_call_operand.hbm [shape: f32[48,128], index: 1, kind: input, shape index: {}]
  %s2 = inlined_call_operand.hbm [shape: f32[16,128], index: 2, kind: output, shape index: {}]
  %s3 = sld [smem:[#allocation0]]
  $region53: #{tpu_custom_call.1} parent=0
    _
  %s5 = ssub.s32 1, %s3
  %s6 = scalar_select 0, %s5, %s3
  $region1: #{tpu_custom_call.1} parent=0
    #allocation2 [shape = 'u8[8192]{0}', space=vmem, size = 0x2000, scoped, tag = 'input window, operand 0']
    #allocation3 [shape = 's32[2]{0}', space=sflag, size = 0x8, scoped, tag = 'scoped memory for tpu_custom_call.1']
    #allocation4 [shape = 's32[2]{0}', space=sflag, size = 0x8, scoped, tag = 'scoped memory for tpu_custom_call.1']
    #allocation5 [shape = 'u8[8192]{0}', space=vmem, size = 0x2000, scoped, tag = 'input window, operand 1']
    #allocation6 [shape = 's32[2]{0}', space=sflag, size = 0x8, scoped, tag = 'scoped memory for tpu_custom_call.1']
    #allocation7 [shape = 'u8[8192]{0}', space=vmem, size = 0x2000, scoped, tag = 'output window, operand 0']
    %7 = vsyncpa [#allocation3], 0
    %s8 = scalar_lea.sflag [#allocation3], 1
    %9 = vsyncpa %s8, 0
    %10 = vsyncpa [#allocation6], 0
    %s11 = scalar_lea.sflag [#allocation6], 1
    %12 = vsyncpa %s11, 0
    %13 = vsyncpa [#allocation4], 0
    %s14 = scalar_lea.sflag [#allocation4], 1
    %15 = vsyncpa %s14, 0
    loop: start=0, step=1, limit=8
    $region2: #{tpu_custom_call.1} parent=1 // loop_pre_header
      _
    $region3: #{tpu_custom_call.1} parent=1 // loop_header
      %s17 = sphi 0, %s21
      %p18 = scmp.ge.s32.totalorder %s17, 8
      %s24 = sphi 0, %s36
      %s25 = sphi 0, %s32
      %s26 = sphi 0, %s24
      %s27 = sphi 0, %s25
      %s28 = sphi 0, %s26
      %s29 = sphi 0, %s27
      %s43 = sphi 0, %s45
      %s46 = sphi 0, %s43
      %s47 = sphi 0, %s46
      %s63 = sphi 0, %s47
      %s73 = sphi 0, %s75
      %s76 = sphi 0, %s73
      %s77 = sphi 0, %s76
      %s93 = sphi 0, %s77
      %s99 = sphi 0, %s101
      %s102 = sphi 0, %s99
      %s103 = sphi 0, %s102
      %s119 = sphi 0, %s103
    $region4: #{tpu_custom_call.1} parent=1 // loop_header_branch
      %20 = sbr.rel (%p18) target = $region8
    $region5: #{tpu_custom_call.1} parent=1 // loop_body
      %s22 = ssub.s32 %s17, 1
      %s23 = ssub.s32 %s17, 2
      %s30 = sadd.s32 1, %s25
      %p31 = scmp.ge.s32.totalorder %s30, 3
      %s32 = scalar_select %p31, 0, %s30
      %s33 = sadd.s32 1, %s24
      %s34 = scalar_select %p31, %s33, %s24
      %p35 = scmp.ge.s32.totalorder %s34, 2
      %s36 = scalar_select %p35, 0, %s34
      %s37 = smul.u32 %s24, 3
      %s38 = sadd.s32 %s37, %s25
      %s39 = smul.u32 %s36, 3
      %s40 = sadd.s32 %s39, %s32
      %s41 = ssub.s32 %s38, %s40
      %p42 = scmp.eq.s32.totalorder %s41, 0
      %s44 = sadd.s32 %s43, 1
      %s45 = scalar_select %p42, %s43, %s44
      %p48 = pneg %p42
      %p49 = scmp.eq.s32.totalorder %s17, 5
      %p50 = por %p48, %p49
      %p51 = scmp.ne.s32.totalorder %s43, %s46
      %p52 = scmp.eq.s32.totalorder %s17, 0
      %p53 = por %p51, %p52
      %p54 = scmp.ne.s32.totalorder %s43, %s46
      %p55 = scmp.eq.s32.totalorder %s22, 5
      %p56 = por %p54, %p55
      %p57 = scmp.ne.s32.totalorder %s46, %s47
      %p58 = scmp.eq.s32.totalorder %s22, 0
      %p59 = por %p57, %p58
      %p60 = scmp.ne.s32.totalorder %s46, %s47
      %p61 = scmp.eq.s32.totalorder %s23, 5
      %p62 = por %p60, %p61
      %p64 = scmp.ne.s32.totalorder %s47, %s63
      %p65 = scmp.eq.s32.totalorder %s23, 0
      %p66 = por %p64, %p65
      %s67 = smul.u32 %s24, 3
      %s68 = sadd.s32 %s67, %s25
      %s69 = smul.u32 %s36, 3
      %s70 = sadd.s32 %s69, %s32
      %s71 = ssub.s32 %s68, %s70
      %p72 = scmp.eq.s32.totalorder %s71, 0
      %s74 = sadd.s32 %s73, 1
      %s75 = scalar_select %p72, %s73, %s74
      %p78 = pneg %p72
      %p79 = scmp.eq.s32.totalorder %s17, 5
      %p80 = por %p78, %p79
      %p81 = scmp.ne.s32.totalorder %s73, %s76
      %p82 = scmp.eq.s32.totalorder %s17, 0
      %p83 = por %p81, %p82
      %p84 = scmp.ne.s32.totalorder %s73, %s76
      %p85 = scmp.eq.s32.totalorder %s22, 5
      %p86 = por %p84, %p85
      %p87 = scmp.ne.s32.totalorder %s76, %s77
      %p88 = scmp.eq.s32.totalorder %s22, 0
      %p89 = por %p87, %p88
      %p90 = scmp.ne.s32.totalorder %s76, %s77
      %p91 = scmp.eq.s32.totalorder %s23, 5
      %p92 = por %p90, %p91
      %p94 = scmp.ne.s32.totalorder %s77, %s93
      %p95 = scmp.eq.s32.totalorder %s23, 0
      %p96 = por %p94, %p95
      %s97 = ssub.s32 %s24, %s36
      %p98 = scmp.eq.s32.totalorder %s97, 0
      %s100 = sadd.s32 %s99, 1
      %s101 = scalar_select %p98, %s99, %s100
      %p104 = pneg %p98
      %p105 = scmp.eq.s32.totalorder %s17, 5
      %p106 = por %p104, %p105
      %p107 = scmp.ne.s32.totalorder %s99, %s102
      %p108 = scmp.eq.s32.totalorder %s17, 0
      %p109 = por %p107, %p108
      %p110 = scmp.ne.s32.totalorder %s99, %s102
      %p111 = scmp.eq.s32.totalorder %s22, 5
      %p112 = por %p110, %p111
      %p113 = scmp.ne.s32.totalorder %s102, %s103
      %p114 = scmp.eq.s32.totalorder %s22, 0
      %p115 = por %p113, %p114
      %p116 = scmp.ne.s32.totalorder %s102, %s103
      %p117 = scmp.eq.s32.totalorder %s23, 5
      %p118 = por %p116, %p117
      %p120 = scmp.ne.s32.totalorder %s103, %s119
      %p121 = scmp.eq.s32.totalorder %s23, 0
      %p122 = por %p120, %p121
      %p123 = scmp.le.s32.totalorder 1, %s17
      %p124 = scmp.lt.s32.totalorder %s17, 7
      %p125 = pnand %p123, %p124
      %p126 = pneg %p125
      // Predicated region
      $region9: #{tpu_custom_call.1} parent=5 // pred_check
        _
      $region10: #{tpu_custom_call.1} parent=5 // pred_check_branch
        %128 = sbr.rel (%p125) target = $region12
      $region11: #{tpu_custom_call.1} parent=5 // pred_region
        %s129 = ssub.s32 %s17, 1
      $region12: #{tpu_custom_call.1} parent=5 // pred_fallthru
        _
      %p130 = scmp.lt.s32.totalorder %s17, 6
      // Predicated region
      $region13: #{tpu_custom_call.1} parent=5 // pred_check
        %p131 = pneg %p130
      $region14: #{tpu_custom_call.1} parent=5 // pred_check_branch
        %133 = sbr.rel (%p131) target = $region16
      $region15: #{tpu_custom_call.1} parent=5 // pred_region
        // Predicated region
        $region17: #{tpu_custom_call.1} parent=15 // pred_check
          %p134 = pneg %p53
        $region18: #{tpu_custom_call.1} parent=15 // pred_check_branch
          %136 = sbr.rel (%p134) target = $region20
        $region19: #{tpu_custom_call.1} parent=15 // pred_region
          %s137 = sand.u32 %s43, 1
          %s138 = scalar_lea.sflag [#allocation3], %s137
          %s139 = sand.u32 %s43, 1
          %s140 = smul.addr %s139, 8
          %s141 = scalar_lea.vmem [#allocation2], %s140
          %s142 = smul.u32 %s24, 3
          %s143 = sadd.s32 %s142, %s25
          %s145 = ssub.s32 128, 128
          %146 = vsyncadd %s138, %s145
          %s147 = smul.addr %s143, 128
          %s148 = scalar_lea.hbm %s0, %s147
          %s150 = sshll.u32 %s141, 4
          %s151 = int_to_ptr.vmem [resolvable:$true] %s150
          %153 = dma.hbm_to_vmem [thread:$0]  %s148, 128, %s151, %s138
        $region20: #{tpu_custom_call.1} parent=15 // pred_fallthru
          _
        // Predicated region
        $region21: #{tpu_custom_call.1} parent=15 // pred_check
          %p154 = pneg %p83
        $region22: #{tpu_custom_call.1} parent=15 // pred_check_branch
          %156 = sbr.rel (%p154) target = $region24
        $region23: #{tpu_custom_call.1} parent=15 // pred_region
          %s157 = sand.u32 %s73, 1
          %s158 = scalar_lea.sflag [#allocation6], %s157
          %s159 = sand.u32 %s73, 1
          %s160 = smul.addr %s159, 8
          %s161 = scalar_lea.vmem [#allocation5], %s160
          %s162 = smul.u32 %s24, 3
          %s163 = sadd.s32 %s162, %s25
          %s165 = ssub.s32 128, 128
          %166 = vsyncadd %s158, %s165
          %s167 = smul.addr %s163, 128
          %s168 = scalar_lea.hbm %s1, %s167
          %s170 = sshll.u32 %s161, 4
          %s171 = int_to_ptr.vmem [resolvable:$true] %s170
          %173 = dma.hbm_to_vmem [thread:$0]  %s168, 128, %s171, %s158
        $region24: #{tpu_custom_call.1} parent=15 // pred_fallthru
          _
      $region16: #{tpu_custom_call.1} parent=5 // pred_fallthru
        _
      %p174 = scmp.le.s32.totalorder 1, %s17
      %p175 = scmp.lt.s32.totalorder %s17, 7
      %p176 = pnand %p174, %p175
      %p177 = pneg %p176
      // Predicated region
      $region25: #{tpu_custom_call.1} parent=5 // pred_check
        _
      $region26: #{tpu_custom_call.1} parent=5 // pred_check_branch
        %179 = sbr.rel (%p176) target = $region28
      $region27: #{tpu_custom_call.1} parent=5 // pred_region
        %s180 = ssub.s32 %s17, 1
        %s181 = sand.u32 %s46, 1
        %s182 = scalar_lea.sflag [#allocation3], %s181
        %s183 = sand.u32 %s46, 1
        %s184 = smul.addr %s183, 8
        %s185 = scalar_lea.vmem [#allocation2], %s184
        // Predicated region
        $region29: #{tpu_custom_call.1} parent=27 // pred_check
          %p186 = pneg %p59
        $region30: #{tpu_custom_call.1} parent=27 // pred_check_branch
          %188 = sbr.rel (%p186) target = $region32
        $region31: #{tpu_custom_call.1} parent=27 // pred_region
          %189 = dma.done %s182, 128
        $region32: #{tpu_custom_call.1} parent=27 // pred_fallthru
          _
        %s190 = sand.u32 %s76, 1
        %s191 = scalar_lea.sflag [#allocation6], %s190
        %s192 = sand.u32 %s76, 1
        %s193 = smul.addr %s192, 8
        %s194 = scalar_lea.vmem [#allocation5], %s193
        // Predicated region
        $region33: #{tpu_custom_call.1} parent=27 // pred_check
          %p195 = pneg %p89
        $region34: #{tpu_custom_call.1} parent=27 // pred_check_branch
          %197 = sbr.rel (%p195) target = $region36
        $region35: #{tpu_custom_call.1} parent=27 // pred_region
          %198 = dma.done %s191, 128
        $region36: #{tpu_custom_call.1} parent=27 // pred_fallthru
          _
        %s199 = sand.u32 %s46, 1
        %s200 = scalar_lea.sflag [#allocation3], %s199
        %s201 = sand.u32 %s46, 1
        %s202 = smul.addr %s201, 8
        %s203 = scalar_lea.vmem [#allocation2], %s202
        %p204 = pneg %p59
        %p205 = pneg %p56
        %s206 = sand.u32 %s76, 1
        %s207 = scalar_lea.sflag [#allocation6], %s206
        %s208 = sand.u32 %s76, 1
        %s209 = smul.addr %s208, 8
        %s210 = scalar_lea.vmem [#allocation5], %s209
        %p211 = pneg %p89
        %p212 = pneg %p86
        %p213 = pneg %p115
        %p214 = pneg %p112
        %s215 = sand.u32 %s102, 1
        %s216 = scalar_lea.sflag [#allocation4], %s215
        %s217 = sand.u32 %s102, 1
        %s218 = smul.addr %s217, 8
        %s219 = scalar_lea.vmem [#allocation7], %s218
        %s220 = smul.u32 %s26, 3
        %s221 = sadd.s32 %s220, %s27
        %s222 = smul.u32 %s26, 3
        %s223 = sadd.s32 %s222, %s27
        %p224 = scmp.eq.s32.totalorder %s27, 0
        // Predicated region
        $region37: #{tpu_custom_call.1} parent=27 // pred_check
          %p225 = pneg %p224
        $region38: #{tpu_custom_call.1} parent=27 // pred_check_branch
          %227 = sbr.rel (%p225) target = $region40
        $region39: #{tpu_custom_call.1} parent=27 // pred_region
          %228 = vst [vmem:[%s219] sm:$0xff] 0.0
        $region40: #{tpu_custom_call.1} parent=27 // pred_fallthru
          _
        %v229 = vld [vmem:[%s185] sm:$0xff]
        %v230 = vld [vmem:[%s194] sm:$0xff]
        %231 = vmax.xlane.f32.xlu0 %v229
        %v232 = vpop.xlane.xlu0 %231
        %v233 = vsub.f32 %v229, %v232
        %v234 = vmul.f32 %v233, 1.442695
        %v235 = vpow.pop %v234
        %236 = vadd.xlane.f32.xlu0 %v235
        %v237 = vpop.xlane.xlu0 %236
        %v238 = vlog2.pop %v237
        %v239 = vmul.f32 %v238, 0.6931472
        %v240 = vadd.f32 %v232, %v239
        %v241 = vsub.f32 %v229, %v240
        %vm242 = vcmp.gt.f32.partialorder %v230, 0.0
        %v243 = vsel %vm242, %v230, 1.0
        %v244 = vlog2.pop %v243
        %v245 = vmul.f32 %v244, 0.6931472
        %v246 = vsub.f32 %v245, %v241
        %v247 = vmul.f32 %v230, %v246
        %v248 = vld [vmem:[%s219] sm:$0xff]
        %v249 = vadd.f32 %v247, 0.0
        %v250 = vadd.f32 %v248, %v249
        %251 = vst [vmem:[%s219] sm:$0xff] %v250
        %s252 = sand.u32 %s102, 1
        %s253 = scalar_lea.sflag [#allocation4], %s252
        %s254 = sand.u32 %s102, 1
        %s255 = smul.addr %s254, 8
        %s256 = scalar_lea.vmem [#allocation7], %s255
        // Predicated region
        $region41: #{tpu_custom_call.1} parent=27 // pred_check
          %p257 = pneg %p112
        $region42: #{tpu_custom_call.1} parent=27 // pred_check_branch
          %259 = sbr.rel (%p257) target = $region44
        $region43: #{tpu_custom_call.1} parent=27 // pred_region
          %s261 = ssub.s32 128, 128
          %262 = vsyncadd %s253, %s261
          %s263 = smul.addr %s26, 128
          %s264 = scalar_lea.hbm %s2, %s263
          %s266 = sshll.u32 %s256, 4
          %s267 = int_to_ptr.vmem [resolvable:$true] %s266
          %269 = dma.vmem_to_hbm [thread:$0]  %s267, 128, %s264, %s253
        $region44: #{tpu_custom_call.1} parent=27 // pred_fallthru
          _
      $region28: #{tpu_custom_call.1} parent=5 // pred_fallthru
        _
      %p270 = scmp.le.s32.totalorder 2, %s17
      // Predicated region
      $region45: #{tpu_custom_call.1} parent=5 // pred_check
        %p271 = pneg %p270
      $region46: #{tpu_custom_call.1} parent=5 // pred_check_branch
        %273 = sbr.rel (%p271) target = $region48
      $region47: #{tpu_custom_call.1} parent=5 // pred_region
        %s274 = ssub.s32 %s17, 2
        // Predicated region
        $region49: #{tpu_custom_call.1} parent=47 // pred_check
          %p275 = pneg %p118
        $region50: #{tpu_custom_call.1} parent=47 // pred_check_branch
          %277 = sbr.rel (%p275) target = $region52
        $region51: #{tpu_custom_call.1} parent=47 // pred_region
          %s278 = sand.u32 %s103, 1
          %s279 = scalar_lea.sflag [#allocation4], %s278
          %s280 = sand.u32 %s103, 1
          %s281 = smul.addr %s280, 8
          %s282 = scalar_lea.vmem [#allocation7], %s281
          %283 = dma.done %s279, 128
        $region52: #{tpu_custom_call.1} parent=47 // pred_fallthru
          _
      $region48: #{tpu_custom_call.1} parent=5 // pred_fallthru
        _
    $region6: #{tpu_custom_call.1} parent=1 // loop_footer
      %s21 = sadd.s32 1, %s17
    $region7: #{tpu_custom_call.1} parent=1 // loop_footer_branch
      %16 = sbr.rel target = $region3
    $region8: #{tpu_custom_call.1} parent=1 // loop_exit
      _
    %284 = vsyncpa [#allocation3], 1
    %s285 = scalar_lea.sflag [#allocation3], 1
    %286 = vsyncpa %s285, 1
    %287 = vsyncpa [#allocation6], 1
    %s288 = scalar_lea.sflag [#allocation6], 1
    %289 = vsyncpa %s288, 1
    %290 = vsyncpa [#allocation4], 1
    %s291 = scalar_lea.sflag [#allocation4], 1
    %292 = vsyncpa %s291, 1

</llo_original>
